<compile_context>
chip_gen: v6e
topology: v6e:2x2x1
jax: 0.10.0
libtpu: 0.0.40
codegen_flags: <defaults>
</compile_context>

<pallas_src>
import functools

import jax
import jax.numpy as jnp
from jax.experimental import pallas as pl
from jax.experimental.pallas import tpu as pltpu


def _round_up(x, m):
    return (x + m - 1) // m * m


_ACTIVATIONS = {
    "relu": lambda v: jnp.maximum(v, 0.0),
    "tanh": jnp.tanh,
    "sigmoid": jax.nn.sigmoid,
    "gelu": jax.nn.gelu,
}


def _resolve_activation(activation):
    if activation is None:
        return None
    if isinstance(activation, str) and activation.lower() in _ACTIVATIONS:
        return _ACTIVATIONS[activation.lower()]
    if callable(activation):
        return activation                     # already a JAX-traceable function
    raise ValueError(f"Unsupported activation: {activation!r}")


# ------------------------------ Pallas kernel ------------------------------ #

def _make_mlp_kernel(num_layers, act_fn, compute_dtype):
    """Fused MLP over one (tm, Kpad_0) row tile.

    Refs (in order):
      x_ref             : (tm, Kpad_0)       input tile (compute_dtype)
      w_ref[l]          : (Kpad_l, Npad_l)   per-layer zero-padded W^T
      b_ref[l]          : (1, Npad_l)        per-layer zero-padded bias (f32)
      o_ref             : (tm, Npad_last)    output tile
    The inter-layer activation is carried as an f32 value (no VMEM scratch).
    """
    def kernel(*refs):
        x_ref = refs[0]
        w_refs = refs[1:1 + num_layers]
        b_refs = refs[1 + num_layers:1 + 2 * num_layers]
        o_ref = refs[1 + 2 * num_layers]

        h = x_ref[...]                                      # compute_dtype
        for l in range(num_layers):                         # static -> unrolled
            lhs = h if l == 0 else h.astype(compute_dtype)
            acc = jnp.dot(lhs, w_refs[l][...],
                          preferred_element_type=jnp.float32)
            acc = acc + b_refs[l][...]                       # (1, Npad_l) f32
            if act_fn is not None:
                acc = act_fn(acc)
            h = acc                                          # f32 carry
        o_ref[...] = h.astype(o_ref.dtype)
    return kernel


# ------------------------------ host wrapper ------------------------------- #

def linear_planes_forward(x, weights, biases, *, activation="relu",
                          compute_dtype=jnp.bfloat16, tm_max=1024,
                          vmem_budget_bytes=28 * 1024 * 1024):
    """Forward of LinearPlanes.

    x        : [..., planes[0]]
    weights  : list of [planes[l], planes[l+1]]  (i.e. W^T of nn.Linear.weight)
    biases   : list of [planes[l+1]]
    activation: None / "relu" / "tanh" / "sigmoid" / "gelu" / JAX callable
    """
    num_layers = len(weights)
    planes = [weights[0].shape[0]] + [w.shape[1] for w in weights]
    lead_shape = x.shape[:-1]
    M = 1
    for d in lead_shape:
        M *= d
    d_in, d_out = planes[0], planes[-1]

    # Per-layer lane-dense padded widths (zero padding is semantics-preserving:
    # padded weight rows/cols are zero, so padded feature columns never feed
    # real outputs; they are sliced off at the end).
    kpads = [_round_up(p, 128) for p in planes[:-1]]
    npads = [_round_up(p, 128) for p in planes[1:]]

    cbytes = jnp.dtype(compute_dtype).itemsize
    obytes = jnp.dtype(x.dtype).itemsize

    # --- VMEM budget -> row-tile size (multiple of 16, 128/256 when large) ---
    w_vmem = sum(k * n for k, n in zip(kpads, npads)) * cbytes   # 1x buffered
    b_vmem = sum(8 * n for n in npads) * 4                       # sublane pad
    per_row = (2 * (kpads[0] * cbytes + npads[-1] * obytes)      # in/out 2x buf
               + 2 * max(npads) * 4)                             # f32 carry slack
    avail = vmem_budget_bytes - w_vmem - b_vmem
    tm_fit = max(16, avail // per_row) if avail > 0 else 16

    tm = int(min(tm_max, tm_fit))
    if tm >= 256:
        tm = (tm // 256) * 256
    elif tm >= 128:
        tm = 128
    else:
        tm = max(16, (tm // 16) * 16)
    tm = min(tm, _round_up(max(M, 16), 16))      # don't tile past the data
    mpad = _round_up(M, tm)

    # --- zero-padded operands (pad x only to Kpad_0, not a global max) ------
    x2 = jnp.reshape(x, (M, d_in))
    x2 = jnp.pad(x2, ((0, mpad - M), (0, kpads[0] - d_in))).astype(compute_dtype)
    w_list = [
        jnp.pad(w, ((0, kp - w.shape[0]), (0, np_ - w.shape[1]))).astype(compute_dtype)
        for w, kp, np_ in zip(weights, kpads, npads)]
    b_list = [
        jnp.pad(b, (0, np_ - b.shape[0])).reshape(1, np_).astype(jnp.float32)
        for b, np_ in zip(biases, npads)]

    kernel = _make_mlp_kernel(num_layers, _resolve_activation(activation),
                              compute_dtype)

    cost = pl.CostEstimate(
        flops=2 * mpad * sum(k * n for k, n in zip(kpads, npads)),
        transcendentals=0,
        bytes_accessed=(mpad * kpads[0] * cbytes
                        + sum(k * n for k, n in zip(kpads, npads)) * cbytes
                        + sum(npads) * 4
                        + mpad * npads[-1] * obytes))

    def weight_spec(kp, np_):
        return pl.BlockSpec((kp, np_), lambda m: (0, 0),
                            pipeline_mode=pl.Buffered(1))

    def bias_spec(np_):
        return pl.BlockSpec((1, np_), lambda m: (0, 0),
                            pipeline_mode=pl.Buffered(1))

    in_specs = ([pl.BlockSpec((tm, kpads[0]), lambda m: (m, 0))]
                + [weight_spec(kp, np_) for kp, np_ in zip(kpads, npads)]
                + [bias_spec(np_) for np_ in npads])

    need = (w_vmem + b_vmem
            + 2 * tm * kpads[0] * cbytes
            + 2 * tm * npads[-1] * obytes
            + 2 * tm * max(npads) * 4
            + (2 << 20))
    vmem_limit = int(min(48 << 20, max(need, 16 << 20)))

    out = pl.pallas_call(
        kernel,
        out_shape=jax.ShapeDtypeStruct((mpad, npads[-1]), x.dtype),
        grid=(mpad // tm,),
        in_specs=in_specs,
        out_specs=pl.BlockSpec((tm, npads[-1]), lambda m: (m, 0)),
        compiler_params=pltpu.CompilerParams(
            dimension_semantics=("parallel",),
            vmem_limit_bytes=vmem_limit),
        cost_estimate=cost,
    )(x2, *w_list, *b_list)

    out = out[:M, :d_out]
    return jnp.reshape(out, lead_shape + (d_out,))


# --------------------------------- main ------------------------------------ #

if __name__ == "__main__":
    key = jax.random.PRNGKey(0)

    # LinearPlanes(planes=[12, 48, 32, 8], activation=nn.ReLU())
    planes = (12, 48, 32, 8)
    batch, seq = 2, 16

    key, k_x = jax.random.split(key)
    x = jax.random.normal(k_x, (batch, seq, planes[0]), jnp.float32)

    # PyTorch nn.Linear default init: U(-1/sqrt(fan_in), 1/sqrt(fan_in)).
    weights, biases = [], []
    for i in range(len(planes) - 1):
        fan_in, fan_out = planes[i], planes[i + 1]
        key, kw, kb = jax.random.split(key, 3)
        bound = 1.0 / (fan_in ** 0.5)
        weights.append(jax.random.uniform(kw, (fan_in, fan_out), jnp.float32,
                                          -bound, bound))  # = W.T
        biases.append(jax.random.uniform(kb, (fan_out,), jnp.float32,
                                         -bound, bound))

    fwd = jax.jit(functools.partial(linear_planes_forward, activation="relu"))
    out = jax.block_until_ready(fwd(x, weights, biases))

    # Pure-JAX f32 reference of nn.Sequential(Linear, ReLU, Linear, ReLU, ...).
    ref = x
    for w_t, b in zip(weights, biases):
        ref = jnp.maximum(ref @ w_t + b, 0.0)

    assert out.shape == (batch, seq, planes[-1]), out.shape
    assert out.dtype == jnp.float32
    err = float(jnp.max(jnp.abs(out - ref)))
    assert jnp.allclose(out, ref, atol=5e-2, rtol=5e-2), err
    print("KERNEL_OK")
</pallas_src>

<mosaic_0001>
module attributes {stable_mosaic.version = 11 : i64} {
  func.func @kernel(%arg0: i32, %arg1: memref<32x128xbf16, #tpu.memory_space<vmem>>, %arg2: memref<128x128xbf16, #tpu.memory_space<vmem>>, %arg3: memref<128x128xbf16, #tpu.memory_space<vmem>>, %arg4: memref<128x128xbf16, #tpu.memory_space<vmem>>, %arg5: memref<1x128xf32, #tpu.memory_space<vmem>>, %arg6: memref<1x128xf32, #tpu.memory_space<vmem>>, %arg7: memref<1x128xf32, #tpu.memory_space<vmem>>, %arg8: memref<32x128xf32, #tpu.memory_space<vmem>>) attributes {dimension_semantics = [#tpu.dimension_semantics<parallel>], iteration_bounds = array<i64: 1>, scalar_prefetch = 0 : i64, scratch_operands = 0 : i64, tpu.core_type = #tpu.core_type<tc>, window_params = [{transform_indices = @transform_0, window_bounds = array<i64: 32, 128>}, {pipeline_mode = #tpu.pipeline_mode<synchronous>, transform_indices = @transform_1, window_bounds = array<i64: 128, 128>}, {pipeline_mode = #tpu.pipeline_mode<synchronous>, transform_indices = @transform_2, window_bounds = array<i64: 128, 128>}, {pipeline_mode = #tpu.pipeline_mode<synchronous>, transform_indices = @transform_3, window_bounds = array<i64: 128, 128>}, {pipeline_mode = #tpu.pipeline_mode<synchronous>, transform_indices = @transform_4, window_bounds = array<i64: 1, 128>}, {pipeline_mode = #tpu.pipeline_mode<synchronous>, transform_indices = @transform_5, window_bounds = array<i64: 1, 128>}, {pipeline_mode = #tpu.pipeline_mode<synchronous>, transform_indices = @transform_6, window_bounds = array<i64: 1, 128>}, {transform_indices = @transform_7, window_bounds = array<i64: 32, 128>}]} {
    %c0 = arith.constant 0 : index
    %c0_0 = arith.constant 0 : index
    %0 = vector.load %arg1[%c0, %c0_0] : memref<32x128xbf16, #tpu.memory_space<vmem>>, vector<32x128xbf16>
    %c0_1 = arith.constant 0 : index
    %c0_2 = arith.constant 0 : index
    %1 = vector.load %arg2[%c0_1, %c0_2] : memref<128x128xbf16, #tpu.memory_space<vmem>>, vector<128x128xbf16>
    %cst = arith.constant dense<0.000000e+00> : vector<32x128xf32>
    %2 = tpu.matmul %0, %1, %cst {dimension_numbers = #tpu.dot_dimension_numbers<[1], [0], [0], [1], [0, 0, 1, 1], [], []>} : vector<32x128xbf16>, vector<128x128xbf16>, vector<32x128xf32> -> vector<32x128xf32>
    %c0_3 = arith.constant 0 : index
    %c0_4 = arith.constant 0 : index
    %3 = vector.load %arg5[%c0_3, %c0_4] : memref<1x128xf32, #tpu.memory_space<vmem>>, vector<1x128xf32>
    %4 = vector.broadcast %3 : vector<1x128xf32> to vector<32x128xf32>
    %5 = arith.addf %2, %4 : vector<32x128xf32>
    %cst_5 = arith.constant 0.000000e+00 : f32
    %6 = vector.broadcast %cst_5 : f32 to vector<32x128xf32>
    %7 = arith.maximumf %5, %6 : vector<32x128xf32>
    %8 = arith.truncf %7 : vector<32x128xf32> to vector<32x128xbf16>
    %c0_6 = arith.constant 0 : index
    %c0_7 = arith.constant 0 : index
    %9 = vector.load %arg3[%c0_6, %c0_7] : memref<128x128xbf16, #tpu.memory_space<vmem>>, vector<128x128xbf16>
    %cst_8 = arith.constant dense<0.000000e+00> : vector<32x128xf32>
    %10 = tpu.matmul %8, %9, %cst_8 {dimension_numbers = #tpu.dot_dimension_numbers<[1], [0], [0], [1], [0, 0, 1, 1], [], []>} : vector<32x128xbf16>, vector<128x128xbf16>, vector<32x128xf32> -> vector<32x128xf32>
    %c0_9 = arith.constant 0 : index
    %c0_10 = arith.constant 0 : index
    %11 = vector.load %arg6[%c0_9, %c0_10] : memref<1x128xf32, #tpu.memory_space<vmem>>, vector<1x128xf32>
    %12 = vector.broadcast %11 : vector<1x128xf32> to vector<32x128xf32>
    %13 = arith.addf %10, %12 : vector<32x128xf32>
    %cst_11 = arith.constant 0.000000e+00 : f32
    %14 = vector.broadcast %cst_11 : f32 to vector<32x128xf32>
    %15 = arith.maximumf %13, %14 : vector<32x128xf32>
    %16 = arith.truncf %15 : vector<32x128xf32> to vector<32x128xbf16>
    %c0_12 = arith.constant 0 : index
    %c0_13 = arith.constant 0 : index
    %17 = vector.load %arg4[%c0_12, %c0_13] : memref<128x128xbf16, #tpu.memory_space<vmem>>, vector<128x128xbf16>
    %cst_14 = arith.constant dense<0.000000e+00> : vector<32x128xf32>
    %18 = tpu.matmul %16, %17, %cst_14 {dimension_numbers = #tpu.dot_dimension_numbers<[1], [0], [0], [1], [0, 0, 1, 1], [], []>} : vector<32x128xbf16>, vector<128x128xbf16>, vector<32x128xf32> -> vector<32x128xf32>
    %c0_15 = arith.constant 0 : index
    %c0_16 = arith.constant 0 : index
    %19 = vector.load %arg7[%c0_15, %c0_16] : memref<1x128xf32, #tpu.memory_space<vmem>>, vector<1x128xf32>
    %20 = vector.broadcast %19 : vector<1x128xf32> to vector<32x128xf32>
    %21 = arith.addf %18, %20 : vector<32x128xf32>
    %cst_17 = arith.constant 0.000000e+00 : f32
    %22 = vector.broadcast %cst_17 : f32 to vector<32x128xf32>
    %23 = arith.maximumf %21, %22 : vector<32x128xf32>
    %c0_18 = arith.constant 0 : index
    %c0_19 = arith.constant 0 : index
    %24 = vector.load %arg8[%c0_18, %c0_19] : memref<32x128xf32, #tpu.memory_space<vmem>>, vector<32x128xf32>
    tpu.vector_store %arg8[%c0_18, %c0_19], %23 {strides = array<i32>} : memref<32x128xf32, #tpu.memory_space<vmem>>, vector<32x128xf32>,
    return
  }
  func.func @transform_0(%arg0: i32) -> (i32, i32) {
    %c0_i32 = arith.constant 0 : i32
    %c0_i32_0 = arith.constant 0 : i32
    return %arg0, %c0_i32 : i32, i32
  }
  func.func @transform_1(%arg0: i32) -> (i32, i32) {
    %c0_i32 = arith.constant 0 : i32
    %c0_i32_0 = arith.constant 0 : i32
    %c0_i32_1 = arith.constant 0 : i32
    return %c0_i32, %c0_i32_0 : i32, i32
  }
  func.func @transform_2(%arg0: i32) -> (i32, i32) {
    %c0_i32 = arith.constant 0 : i32
    %c0_i32_0 = arith.constant 0 : i32
    %c0_i32_1 = arith.constant 0 : i32
    return %c0_i32, %c0_i32_0 : i32, i32
  }
  func.func @transform_3(%arg0: i32) -> (i32, i32) {
    %c0_i32 = arith.constant 0 : i32
    %c0_i32_0 = arith.constant 0 : i32
    %c0_i32_1 = arith.constant 0 : i32
    return %c0_i32, %c0_i32_0 : i32, i32
  }
  func.func @transform_4(%arg0: i32) -> (i32, i32) {
    %c0_i32 = arith.constant 0 : i32
    %c0_i32_0 = arith.constant 0 : i32
    %c0_i32_1 = arith.constant 0 : i32
    return %c0_i32, %c0_i32_0 : i32, i32
  }
  func.func @transform_5(%arg0: i32) -> (i32, i32) {
    %c0_i32 = arith.constant 0 : i32
    %c0_i32_0 = arith.constant 0 : i32
    %c0_i32_1 = arith.constant 0 : i32
    return %c0_i32, %c0_i32_0 : i32, i32
  }
  func.func @transform_6(%arg0: i32) -> (i32, i32) {
    %c0_i32 = arith.constant 0 : i32
    %c0_i32_0 = arith.constant 0 : i32
    %c0_i32_1 = arith.constant 0 : i32
    return %c0_i32, %c0_i32_0 : i32, i32
  }
  func.func @transform_7(%arg0: i32) -> (i32, i32) {
    %c0_i32 = arith.constant 0 : i32
    %c0_i32_0 = arith.constant 0 : i32
    return %arg0, %c0_i32 : i32, i32
  }
}

</mosaic_0001>

<llo_original>
// kernel: linear_planes_forward.1
$region0: #{linear_planes_forward.1}
  #allocation0 [shape = 'u32[]', space=smem, size = 0x4, offset = 0x4, fixed_abs, tag = 'smem constant byte address 0x4 - core index']
  #allocation1 [shape = 'u32[144,128]{1,0:T(1,128)}', space=vmem, size = 0x12000, scoped, tag = 'internal scratch']
  %s0 = inlined_call_operand.vmem [shape: bf16[32,128], index: 0, kind: input, shape index: {}]
  %s1 = inlined_call_operand.vmem [shape: bf16[128,128], index: 1, kind: input, shape index: {}]
  %s2 = inlined_call_operand.vmem [shape: bf16[128,128], index: 2, kind: input, shape index: {}]
  %s3 = inlined_call_operand.vmem [shape: bf16[128,128], index: 3, kind: input, shape index: {}]
  %s4 = inlined_call_operand.vmem [shape: f32[1,128], index: 4, kind: input, shape index: {}]
  %s5 = inlined_call_operand.vmem [shape: f32[1,128], index: 5, kind: input, shape index: {}]
  %s6 = inlined_call_operand.vmem [shape: f32[1,128], index: 6, kind: input, shape index: {}]
  %s7 = inlined_call_operand.vmem [shape: f32[32,128], index: 7, kind: output, shape index: {}]
  %s8 = sld [smem:[#allocation0]]
  $region38: #{linear_planes_forward.1} parent=0
    _
  %s10 = ssub.s32 1, %s8
  %s11 = scalar_select 0, %s10, %s8
  // Predicated region
  $region2: #{linear_planes_forward.1} parent=0 // pred_check
    _
  $region3: #{linear_planes_forward.1} parent=0 // pred_check_branch
    %13 = sbr.rel (0) target = $region5
  $region4: #{linear_planes_forward.1} parent=0 // pred_region
    _
  $region5: #{linear_planes_forward.1} parent=0 // pred_fallthru
    _
  // Predicated region
  $region6: #{linear_planes_forward.1} parent=0 // pred_check
    _
  $region7: #{linear_planes_forward.1} parent=0 // pred_check_branch
    %15 = sbr.rel (0) target = $region9
  $region8: #{linear_planes_forward.1} parent=0 // pred_region
    _
  $region9: #{linear_planes_forward.1} parent=0 // pred_fallthru
    _
  // Predicated region
  $region10: #{linear_planes_forward.1} parent=0 // pred_check
    _
  $region11: #{linear_planes_forward.1} parent=0 // pred_check_branch
    %17 = sbr.rel (0) target = $region13
  $region12: #{linear_planes_forward.1} parent=0 // pred_region
    _
  $region13: #{linear_planes_forward.1} parent=0 // pred_fallthru
    _
  // Predicated region
  $region14: #{linear_planes_forward.1} parent=0 // pred_check
    _
  $region15: #{linear_planes_forward.1} parent=0 // pred_check_branch
    %19 = sbr.rel (0) target = $region17
  $region16: #{linear_planes_forward.1} parent=0 // pred_region
    _
  $region17: #{linear_planes_forward.1} parent=0 // pred_fallthru
    _
  // Predicated region
  $region18: #{linear_planes_forward.1} parent=0 // pred_check
    _
  $region19: #{linear_planes_forward.1} parent=0 // pred_check_branch
    %21 = sbr.rel (0) target = $region21
  $region20: #{linear_planes_forward.1} parent=0 // pred_region
    _
  $region21: #{linear_planes_forward.1} parent=0 // pred_fallthru
    _
  // Predicated region
  $region22: #{linear_planes_forward.1} parent=0 // pred_check
    _
  $region23: #{linear_planes_forward.1} parent=0 // pred_check_branch
    %23 = sbr.rel (0) target = $region25
  $region24: #{linear_planes_forward.1} parent=0 // pred_region
    _
  $region25: #{linear_planes_forward.1} parent=0 // pred_fallthru
    _
  // Predicated region
  $region26: #{linear_planes_forward.1} parent=0 // pred_check
    _
  $region27: #{linear_planes_forward.1} parent=0 // pred_check_branch
    %25 = sbr.rel (0) target = $region29
  $region28: #{linear_planes_forward.1} parent=0 // pred_region
    _
  $region29: #{linear_planes_forward.1} parent=0 // pred_fallthru
    _
  %v27 = vld [vmem:[%s0] sm:$0xf]
  %v28 = vld [vmem:[%s0 + $0x4] sm:$0xf]
  %v29 = vld [vmem:[%s0 + $0x8] sm:$0xf]
  %v30 = vld [vmem:[%s0 + $0xc] sm:$0xf]
  %v31 = vld [vmem:[%s1] sm:$0xf]
  %v32 = vld [vmem:[%s1 + $0x4] sm:$0xf]
  %v33 = vld [vmem:[%s1 + $0x8] sm:$0xf]
  %v34 = vld [vmem:[%s1 + $0xc] sm:$0xf]
  %v35 = vld [vmem:[%s1 + $0x10] sm:$0xf]
  %v36 = vld [vmem:[%s1 + $0x14] sm:$0xf]
  %v37 = vld [vmem:[%s1 + $0x18] sm:$0xf]
  %v38 = vld [vmem:[%s1 + $0x1c] sm:$0xf]
  %v39 = vld [vmem:[%s1 + $0x20] sm:$0xf]
  %v40 = vld [vmem:[%s1 + $0x24] sm:$0xf]
  %v41 = vld [vmem:[%s1 + $0x28] sm:$0xf]
  %v42 = vld [vmem:[%s1 + $0x2c] sm:$0xf]
  %v43 = vld [vmem:[%s1 + $0x30] sm:$0xf]
  %v44 = vld [vmem:[%s1 + $0x34] sm:$0xf]
  %v45 = vld [vmem:[%s1 + $0x38] sm:$0xf]
  %v46 = vld [vmem:[%s1 + $0x3c] sm:$0xf]
  %v47 = vld [vmem:[%s4] sm:$0x1]
  %v49 = vlaneseq
  %v50 = vshrl.u32 %v49, 7
  %v51 = vsub.s32 0, %v50
  %v52 = vrot.slane %v47, %v51
  %v58 = vunpack.c.l.b16 %v27
  %v59 = vunpack.c.l.b16 %v28
  %v60 = vunpack.c.l.b16 %v29
  %v61 = vunpack.c.l.b16 %v30
  %v62 = vpack.c.b16 %v59, %v58
  %v63 = vpack.c.b16 %v61, %v60
  %v82 = vunpack.c.l.b16 %v31
  %v83 = vunpack.c.l.b16 %v32
  %v84 = vunpack.c.l.b16 %v33
  %v85 = vunpack.c.l.b16 %v34
  %v86 = vunpack.c.l.b16 %v35
  %v87 = vunpack.c.l.b16 %v36
  %v88 = vunpack.c.l.b16 %v37
  %v89 = vunpack.c.l.b16 %v38
  %v90 = vunpack.c.l.b16 %v39
  %v91 = vunpack.c.l.b16 %v40
  %v92 = vunpack.c.l.b16 %v41
  %v93 = vunpack.c.l.b16 %v42
  %v94 = vunpack.c.l.b16 %v43
  %v95 = vunpack.c.l.b16 %v44
  %v96 = vunpack.c.l.b16 %v45
  %v97 = vunpack.c.l.b16 %v46
  %v98 = vpack.c.b16 %v83, %v82
  %v99 = vpack.c.b16 %v85, %v84
  %v100 = vpack.c.b16 %v87, %v86
  %v101 = vpack.c.b16 %v89, %v88
  %v102 = vpack.c.b16 %v91, %v90
  %v103 = vpack.c.b16 %v93, %v92
  %v104 = vpack.c.b16 %v95, %v94
  %v105 = vpack.c.b16 %v97, %v96
  %114 = vmatprep.subr.bf16.mxu0 0
  %115 = vmatpush1.bf16.msra.mxu0 %v105
  %116 = vmatprep.subr.bf16.mxu0 0
  %117 = vmatpush1.bf16.msra.mxu0 %v104
  %118 = vmatprep.subr.bf16.mxu0 0
  %119 = vmatpush1.bf16.msra.mxu0 %v103
  %120 = vmatprep.subr.bf16.mxu0 0
  %121 = vmatpush1.bf16.msra.mxu0 %v102
  %122 = vmatprep.subr.bf16.mxu0 0
  %123 = vmatpush1.bf16.msra.mxu0 %v101
  %124 = vmatprep.subr.bf16.mxu0 0
  %125 = vmatpush1.bf16.msra.mxu0 %v100
  %126 = vmatprep.subr.bf16.mxu0 0
  %127 = vmatpush1.bf16.msra.mxu0 %v99
  %128 = vmatprep.subr.bf16.mxu0 0
  %129 = vmatpush1.bf16.msra.mxu0 %v98
  %130 = vmatprep.subr.bf16.mxu0 0
  %131 = vmatpush2.bf16.msra.mxu0 0
  %132 = vmatprep.subr.bf16.mxu0 0
  %133 = vmatpush2.bf16.msra.mxu0 0
  %134 = vmatprep.subr.bf16.mxu0 0
  %135 = vmatpush2.bf16.msra.mxu0 0
  %136 = vmatprep.subr.bf16.mxu0 0
  %137 = vmatpush2.bf16.msra.mxu0 0
  %138 = vmatprep.subr.bf16.mxu0 0
  %139 = vmatpush2.bf16.msra.mxu0 0
  %140 = vmatprep.subr.bf16.mxu0 0
  %141 = vmatpush2.bf16.msra.mxu0 0
  %142 = vmatprep.subr.bf16.mxu0 0
  %143 = vmatpush2.bf16.msra.mxu0 0
  %144 = vmatprep.subr.bf16.mxu0 0
  %145 = vmatpush2.bf16.msra.mxu0 0
  %146 = vmatprep.mubr.bf16.mxu0 0
  %147 = vmatmul.mubr.bf16.gmra.mxu0 %v62
  %v148 = vpop.f32.mrf.mxu0
  %v149 = vadd.f32 %v52, %v148
  %v150 = vpop.f32.mrf.mxu0
  %v151 = vpop.f32.mrf.mxu0
  %v152 = vadd.f32 %v52, %v151
  %v153 = vpop.f32.mrf.mxu0
  %154 = vmatprep.mubr.bf16.mxu0 0
  %155 = vmatmul.mubr.bf16.gmra.mxu0 %v63
  %v156 = vpop.f32.mrf.mxu0
  %v157 = vadd.f32 %v52, %v156
  %v158 = vpop.f32.mrf.mxu0
  %v159 = vpop.f32.mrf.mxu0
  %v160 = vadd.f32 %v52, %v159
  %v161 = vpop.f32.mrf.mxu0
  %162 = vdwg.mxu0
  %v163 = vmax.f32 %v149, 0.0
  %v164 = vmax.f32 %v152, 0.0
  %v165 = vmax.f32 %v157, 0.0
  %v166 = vmax.f32 %v160, 0.0
  %v167 = vpack.c.bf16 %v164, %v163
  %v168 = vpack.c.bf16 %v166, %v165
  %v169 = vld [vmem:[%s2] sm:$0xf]
  %v170 = vld [vmem:[%s2 + $0x4] sm:$0xf]
  %v171 = vld [vmem:[%s2 + $0x8] sm:$0xf]
  %v172 = vld [vmem:[%s2 + $0xc] sm:$0xf]
  %v173 = vld [vmem:[%s2 + $0x10] sm:$0xf]
  %v174 = vld [vmem:[%s2 + $0x14] sm:$0xf]
  %v175 = vld [vmem:[%s2 + $0x18] sm:$0xf]
  %v176 = vld [vmem:[%s2 + $0x1c] sm:$0xf]
  %v177 = vld [vmem:[%s2 + $0x20] sm:$0xf]
  %v178 = vld [vmem:[%s2 + $0x24] sm:$0xf]
  %v179 = vld [vmem:[%s2 + $0x28] sm:$0xf]
  %v180 = vld [vmem:[%s2 + $0x2c] sm:$0xf]
  %v181 = vld [vmem:[%s2 + $0x30] sm:$0xf]
  %v182 = vld [vmem:[%s2 + $0x34] sm:$0xf]
  %v183 = vld [vmem:[%s2 + $0x38] sm:$0xf]
  %v184 = vld [vmem:[%s2 + $0x3c] sm:$0xf]
  %v185 = vld [vmem:[%s5] sm:$0x1]
  %v187 = vlaneseq
  %v188 = vshrl.u32 %v187, 7
  %v189 = vsub.s32 0, %v188
  %v190 = vrot.slane %v185, %v189
  %v208 = vunpack.c.l.b16 %v169
  %v209 = vunpack.c.l.b16 %v170
  %v210 = vunpack.c.l.b16 %v171
  %v211 = vunpack.c.l.b16 %v172
  %v212 = vunpack.c.l.b16 %v173
  %v213 = vunpack.c.l.b16 %v174
  %v214 = vunpack.c.l.b16 %v175
  %v215 = vunpack.c.l.b16 %v176
  %v216 = vunpack.c.l.b16 %v177
  %v217 = vunpack.c.l.b16 %v178
  %v218 = vunpack.c.l.b16 %v179
  %v219 = vunpack.c.l.b16 %v180
  %v220 = vunpack.c.l.b16 %v181
  %v221 = vunpack.c.l.b16 %v182
  %v222 = vunpack.c.l.b16 %v183
  %v223 = vunpack.c.l.b16 %v184
  %v224 = vpack.c.b16 %v209, %v208
  %v225 = vpack.c.b16 %v211, %v210
  %v226 = vpack.c.b16 %v213, %v212
  %v227 = vpack.c.b16 %v215, %v214
  %v228 = vpack.c.b16 %v217, %v216
  %v229 = vpack.c.b16 %v219, %v218
  %v230 = vpack.c.b16 %v221, %v220
  %v231 = vpack.c.b16 %v223, %v222
  %240 = vmatprep.subr.bf16.mxu0 0
  %241 = vmatpush1.bf16.msra.mxu0 %v231
  %242 = vmatprep.subr.bf16.mxu0 0
  %243 = vmatpush1.bf16.msra.mxu0 %v230
  %244 = vmatprep.subr.bf16.mxu0 0
  %245 = vmatpush1.bf16.msra.mxu0 %v229
  %246 = vmatprep.subr.bf16.mxu0 0
  %247 = vmatpush1.bf16.msra.mxu0 %v228
  %248 = vmatprep.subr.bf16.mxu0 0
  %249 = vmatpush1.bf16.msra.mxu0 %v227
  %250 = vmatprep.subr.bf16.mxu0 0
  %251 = vmatpush1.bf16.msra.mxu0 %v226
  %252 = vmatprep.subr.bf16.mxu0 0
  %253 = vmatpush1.bf16.msra.mxu0 %v225
  %254 = vmatprep.subr.bf16.mxu0 0
  %255 = vmatpush1.bf16.msra.mxu0 %v224
  %256 = vmatprep.subr.bf16.mxu0 0
  %257 = vmatpush2.bf16.msra.mxu0 0
  %258 = vmatprep.subr.bf16.mxu0 0
  %259 = vmatpush2.bf16.msra.mxu0 0
  %260 = vmatprep.subr.bf16.mxu0 0
  %261 = vmatpush2.bf16.msra.mxu0 0
  %262 = vmatprep.subr.bf16.mxu0 0
  %263 = vmatpush2.bf16.msra.mxu0 0
  %264 = vmatprep.subr.bf16.mxu0 0
  %265 = vmatpush2.bf16.msra.mxu0 0
  %266 = vmatprep.subr.bf16.mxu0 0
  %267 = vmatpush2.bf16.msra.mxu0 0
  %268 = vmatprep.subr.bf16.mxu0 0
  %269 = vmatpush2.bf16.msra.mxu0 0
  %270 = vmatprep.subr.bf16.mxu0 0
  %271 = vmatpush2.bf16.msra.mxu0 0
  %272 = vmatprep.mubr.bf16.mxu0 0
  %273 = vmatmul.mubr.bf16.gmra.mxu0 %v167
  %v274 = vpop.f32.mrf.mxu0
  %v275 = vadd.f32 %v190, %v274
  %v276 = vpop.f32.mrf.mxu0
  %v277 = vpop.f32.mrf.mxu0
  %v278 = vadd.f32 %v190, %v277
  %v279 = vpop.f32.mrf.mxu0
  %280 = vmatprep.mubr.bf16.mxu0 0
  %281 = vmatmul.mubr.bf16.gmra.mxu0 %v168
  %v282 = vpop.f32.mrf.mxu0
  %v283 = vadd.f32 %v190, %v282
  %v284 = vpop.f32.mrf.mxu0
  %v285 = vpop.f32.mrf.mxu0
  %v286 = vadd.f32 %v190, %v285
  %v287 = vpop.f32.mrf.mxu0
  %288 = vdwg.mxu0
  %v289 = vmax.f32 %v275, 0.0
  %v290 = vmax.f32 %v278, 0.0
  %v291 = vmax.f32 %v283, 0.0
  %v292 = vmax.f32 %v286, 0.0
  %v293 = vpack.c.bf16 %v290, %v289
  %v294 = vpack.c.bf16 %v292, %v291
  %v295 = vld [vmem:[%s3] sm:$0xf]
  %v296 = vld [vmem:[%s3 + $0x4] sm:$0xf]
  %v297 = vld [vmem:[%s3 + $0x8] sm:$0xf]
  %v298 = vld [vmem:[%s3 + $0xc] sm:$0xf]
  %v299 = vld [vmem:[%s3 + $0x10] sm:$0xf]
  %v300 = vld [vmem:[%s3 + $0x14] sm:$0xf]
  %v301 = vld [vmem:[%s3 + $0x18] sm:$0xf]
  %v302 = vld [vmem:[%s3 + $0x1c] sm:$0xf]
  %v303 = vld [vmem:[%s3 + $0x20] sm:$0xf]
  %v304 = vld [vmem:[%s3 + $0x24] sm:$0xf]
  %v305 = vld [vmem:[%s3 + $0x28] sm:$0xf]
  %v306 = vld [vmem:[%s3 + $0x2c] sm:$0xf]
  %v307 = vld [vmem:[%s3 + $0x30] sm:$0xf]
  %v308 = vld [vmem:[%s3 + $0x34] sm:$0xf]
  %v309 = vld [vmem:[%s3 + $0x38] sm:$0xf]
  %v310 = vld [vmem:[%s3 + $0x3c] sm:$0xf]
  %v311 = vld [vmem:[%s6] sm:$0x1]
  %v313 = vlaneseq
  %v314 = vshrl.u32 %v313, 7
  %v315 = vsub.s32 0, %v314
  %v316 = vrot.slane %v311, %v315
  %v334 = vunpack.c.l.b16 %v295
  %v335 = vunpack.c.l.b16 %v296
  %v336 = vunpack.c.l.b16 %v297
  %v337 = vunpack.c.l.b16 %v298
  %v338 = vunpack.c.l.b16 %v299
  %v339 = vunpack.c.l.b16 %v300
  %v340 = vunpack.c.l.b16 %v301
  %v341 = vunpack.c.l.b16 %v302
  %v342 = vunpack.c.l.b16 %v303
  %v343 = vunpack.c.l.b16 %v304
  %v344 = vunpack.c.l.b16 %v305
  %v345 = vunpack.c.l.b16 %v306
  %v346 = vunpack.c.l.b16 %v307
  %v347 = vunpack.c.l.b16 %v308
  %v348 = vunpack.c.l.b16 %v309
  %v349 = vunpack.c.l.b16 %v310
  %v350 = vpack.c.b16 %v335, %v334
  %v351 = vpack.c.b16 %v337, %v336
  %v352 = vpack.c.b16 %v339, %v338
  %v353 = vpack.c.b16 %v341, %v340
  %v354 = vpack.c.b16 %v343, %v342
  %v355 = vpack.c.b16 %v345, %v344
  %v356 = vpack.c.b16 %v347, %v346
  %v357 = vpack.c.b16 %v349, %v348
  %366 = vmatprep.subr.bf16.mxu0 0
  %367 = vmatpush1.bf16.msra.mxu0 %v357
  %368 = vmatprep.subr.bf16.mxu0 0
  %369 = vmatpush1.bf16.msra.mxu0 %v356
  %370 = vmatprep.subr.bf16.mxu0 0
  %371 = vmatpush1.bf16.msra.mxu0 %v355
  %372 = vmatprep.subr.bf16.mxu0 0
  %373 = vmatpush1.bf16.msra.mxu0 %v354
  %374 = vmatprep.subr.bf16.mxu0 0
  %375 = vmatpush1.bf16.msra.mxu0 %v353
  %376 = vmatprep.subr.bf16.mxu0 0
  %377 = vmatpush1.bf16.msra.mxu0 %v352
  %378 = vmatprep.subr.bf16.mxu0 0
  %379 = vmatpush1.bf16.msra.mxu0 %v351
  %380 = vmatprep.subr.bf16.mxu0 0
  %381 = vmatpush1.bf16.msra.mxu0 %v350
  %382 = vmatprep.subr.bf16.mxu0 0
  %383 = vmatpush2.bf16.msra.mxu0 0
  %384 = vmatprep.subr.bf16.mxu0 0
  %385 = vmatpush2.bf16.msra.mxu0 0
  %386 = vmatprep.subr.bf16.mxu0 0
  %387 = vmatpush2.bf16.msra.mxu0 0
  %388 = vmatprep.subr.bf16.mxu0 0
  %389 = vmatpush2.bf16.msra.mxu0 0
  %390 = vmatprep.subr.bf16.mxu0 0
  %391 = vmatpush2.bf16.msra.mxu0 0
  %392 = vmatprep.subr.bf16.mxu0 0
  %393 = vmatpush2.bf16.msra.mxu0 0
  %394 = vmatprep.subr.bf16.mxu0 0
  %395 = vmatpush2.bf16.msra.mxu0 0
  %396 = vmatprep.subr.bf16.mxu0 0
  %397 = vmatpush2.bf16.msra.mxu0 0
  %398 = vmatprep.mubr.bf16.mxu0 0
  %399 = vmatmul.mubr.bf16.gmra.mxu0 %v293
  %v400 = vpop.f32.mrf.mxu0
  %v401 = vadd.f32 %v316, %v400
  %v402 = vpop.f32.mrf.mxu0
  %v403 = vpop.f32.mrf.mxu0
  %v404 = vadd.f32 %v316, %v403
  %v405 = vpop.f32.mrf.mxu0
  %406 = vmatprep.mubr.bf16.mxu0 0
  %407 = vmatmul.mubr.bf16.gmra.mxu0 %v294
  %v408 = vpop.f32.mrf.mxu0
  %v409 = vadd.f32 %v316, %v408
  %v410 = vpop.f32.mrf.mxu0
  %v411 = vpop.f32.mrf.mxu0
  %v412 = vadd.f32 %v316, %v411
  %v413 = vpop.f32.mrf.mxu0
  %414 = vdwg.mxu0
  %v415 = vmax.f32 %v401, 0.0
  %v416 = vmax.f32 %v404, 0.0
  %v417 = vmax.f32 %v409, 0.0
  %v418 = vmax.f32 %v412, 0.0
  %419 = vst [vmem:[%s7] sm:$0xff] %v415
  %420 = vst [vmem:[%s7 + $0x8] sm:$0xff] %v416
  %421 = vst [vmem:[%s7 + $0x10] sm:$0xff] %v417
  %422 = vst [vmem:[%s7 + $0x18] sm:$0xff] %v418
  // Predicated region
  $region30: #{linear_planes_forward.1} parent=0 // pred_check
    _
  $region31: #{linear_planes_forward.1} parent=0 // pred_check_branch
    %424 = sbr.rel (0) target = $region33
  $region32: #{linear_planes_forward.1} parent=0 // pred_region
    _
  $region33: #{linear_planes_forward.1} parent=0 // pred_fallthru
    _
  // Predicated region
  $region34: #{linear_planes_forward.1} parent=0 // pred_check
    _
  $region35: #{linear_planes_forward.1} parent=0 // pred_check_branch
    %426 = sbr.rel (0) target = $region37
  $region36: #{linear_planes_forward.1} parent=0 // pred_region
    _
  $region37: #{linear_planes_forward.1} parent=0 // pred_fallthru
    _

</llo_original>
